<compile_context>
chip_gen: v7x
topology: tpu7x:2x2x1
jax: 0.10.0
libtpu: 0.0.40
codegen_flags: <defaults>
</compile_context>

<pallas_src>
import jax
import jax.numpy as jnp
from jax.experimental import pallas as pl
from jax.experimental.pallas import tpu as pltpu


def _fused_mlp_kernel(x_ref, w0_ref, wh_ref, wl_ref, hid_ref, last_ref):
    """Fused forward pass of the whole ParameterList MLP.

    x_ref:   (B, D_in)      input activations
    w0_ref:  (D_in, H)      first-layer weight, pre-transposed
    wh_ref:  (L-1, H, H)    hidden-layer weights, pre-transposed, stacked
    wl_ref:  (H, N_pad)     last-layer weight, pre-transposed, lane-padded to 128
    hid_ref: (L, B, H)      post-ReLU hidden states (all layers except the last)
    last_ref:(B, N_pad)     final (no-ReLU) output, lane-padded
    """
    num_stacked = wh_ref.shape[0]  # static at trace time

    # Layer 0: (B, D_in) @ (D_in, H) with fused ReLU; accumulate in f32 on the MXU.
    h = jnp.dot(x_ref[...], w0_ref[...], preferred_element_type=jnp.float32)
    h = jnp.maximum(h, 0.0)
    hid_ref[0] = h.astype(hid_ref.dtype)

    # Hidden layers 1..L-1: activation stays on-chip; statically unrolled loop.
    for i in range(num_stacked):
        h = jnp.dot(h, wh_ref[i], preferred_element_type=jnp.float32)
        h = jnp.maximum(h, 0.0)
        hid_ref[i + 1] = h.astype(hid_ref.dtype)

    # Final layer: no ReLU.  Padded weight columns are zero -> padded lanes are zero.
    out = jnp.dot(h, wl_ref[...], preferred_element_type=jnp.float32)
    last_ref[...] = out.astype(last_ref.dtype)


def init_params(key, input_size, output_size, num_hidden_layer=10, hidden_size=128):
    """Mirrors NeuralNet05.__init__ (torch.rand -> uniform[0,1)); weights kept in the
    torch layout (out_features, in_features)."""
    params = []
    in_sz = input_size
    keys = jax.random.split(key, num_hidden_layer + 1)
    for i in range(num_hidden_layer):
        params.append(jax.random.uniform(keys[i], (hidden_size, in_sz), dtype=jnp.float32))
        in_sz = hidden_size
    params.append(jax.random.uniform(keys[-1], (output_size, hidden_size), dtype=jnp.float32))
    return params


def prepare_params(params):
    """One-time prep (paid zero times per forward): transpose to (in, out), stack the
    equal-shaped hidden weights, lane-pad the final layer to a multiple of 128."""
    assert len(params) >= 3, "expected at least 2 hidden layers + output layer"
    output_size = params[-1].shape[0]
    n_pad = ((output_size + 127) // 128) * 128
    w0_t = params[0].T                                                 # (D_in, H)
    wh_t = jnp.stack([w.T for w in params[1:-1]])                      # (L-1, H, H)
    wl_t = jnp.pad(params[-1].T, ((0, 0), (0, n_pad - output_size)))   # (H, N_pad)
    return w0_t, wh_t, wl_t, output_size


def neural_net05_forward(x, prepared):
    """Reproduces NeuralNet05.forward: returns (last_output, list_of_hidden_states).
    ReLU is applied to every layer except the final one."""
    # TODO(synk): the per-layer print() debug statements of the torch forward are not
    # reproduced (non-semantic logging only).
    w0_t, wh_t, wl_t, output_size = prepared
    B = x.shape[0]
    hidden_size = w0_t.shape[1]
    num_hidden = wh_t.shape[0] + 1
    n_pad = wl_t.shape[1]

    vmem = pl.BlockSpec(memory_space=pltpu.MemorySpace.VMEM)
    hid_stack, last_pad = pl.pallas_call(
        _fused_mlp_kernel,
        out_shape=(
            jax.ShapeDtypeStruct((num_hidden, B, hidden_size), x.dtype),
            jax.ShapeDtypeStruct((B, n_pad), x.dtype),
        ),
        in_specs=[vmem, vmem, vmem, vmem],
        out_specs=(vmem, vmem),
    )(x, w0_t, wh_t, wl_t)

    last = last_pad[:, :output_size]
    hidden_states = [hid_stack[i] for i in range(num_hidden)] + [last]
    return last, hidden_states


if __name__ == "__main__":
    # Small, module-consistent shapes.
    batch = 8
    input_size = 64
    output_size = 32
    num_hidden_layer = 3
    hidden_size = 128

    key = jax.random.PRNGKey(0)
    k_x, k_p = jax.random.split(key)
    x = jax.random.uniform(k_x, (batch, input_size), dtype=jnp.float32)
    params = init_params(k_p, input_size, output_size, num_hidden_layer, hidden_size)
    prepared = prepare_params(params)

    last, hiddens = neural_net05_forward(x, prepared)
    last = jax.block_until_ready(last)
    for h in hiddens:
        jax.block_until_ready(h)

    # Plain-JAX reference (same semantics as F.linear(no bias) + ReLU chain).
    ref_hiddens = []
    ref = x
    for idx, w in enumerate(params):
        ref = ref @ w.T
        if idx != len(params) - 1:
            ref = jnp.maximum(ref, 0.0)
        ref_hiddens.append(ref)

    assert last.shape == (batch, output_size)
    assert len(hiddens) == num_hidden_layer + 1
    for got, want in zip(hiddens, ref_hiddens):
        assert got.shape == want.shape, (got.shape, want.shape)
        assert jnp.allclose(got, want, rtol=1e-4, atol=1e-4)
    assert jnp.allclose(last, ref_hiddens[-1], rtol=1e-4, atol=1e-4)

    print("KERNEL_OK")
</pallas_src>

<mosaic_0001>
module attributes {stable_mosaic.version = 11 : i64} {
  func.func @_fused_mlp_kernel(%arg0: memref<8x64xf32, #tpu.memory_space<vmem>>, %arg1: memref<64x128xf32, #tpu.memory_space<vmem>>, %arg2: memref<2x128x128xf32, #tpu.memory_space<vmem>>, %arg3: memref<128x128xf32, #tpu.memory_space<vmem>>, %arg4: memref<3x8x128xf32, #tpu.memory_space<vmem>>, %arg5: memref<8x128xf32, #tpu.memory_space<vmem>>) attributes {dimension_semantics = [], scalar_prefetch = 0 : i64, scratch_operands = 0 : i64, tpu.core_type = #tpu.core_type<tc>} {
    %c0 = arith.constant 0 : index
    %c0_0 = arith.constant 0 : index
    %0 = vector.load %arg0[%c0, %c0_0] : memref<8x64xf32, #tpu.memory_space<vmem>>, vector<8x64xf32>
    %c0_1 = arith.constant 0 : index
    %c0_2 = arith.constant 0 : index
    %1 = vector.load %arg1[%c0_1, %c0_2] : memref<64x128xf32, #tpu.memory_space<vmem>>, vector<64x128xf32>
    %cst = arith.constant dense<0.000000e+00> : vector<8x128xf32>
    %2 = tpu.matmul %0, %1, %cst {dimension_numbers = #tpu.dot_dimension_numbers<[1], [0], [0], [1], [0, 0, 1, 1], [], []>} : vector<8x64xf32>, vector<64x128xf32>, vector<8x128xf32> -> vector<8x128xf32>
    %cst_3 = arith.constant 0.000000e+00 : f32
    %3 = vector.broadcast %cst_3 : f32 to vector<8x128xf32>
    %4 = arith.maximumf %2, %3 : vector<8x128xf32>
    %c0_4 = arith.constant 0 : index
    %c0_5 = arith.constant 0 : index
    %c0_6 = arith.constant 0 : index
    %5 = vector.load %arg4[%c0_4, %c0_5, %c0_6] : memref<3x8x128xf32, #tpu.memory_space<vmem>>, vector<1x8x128xf32>
    %6 = vector.shape_cast %5 : vector<1x8x128xf32> to vector<8x128xf32>
    %7 = vector.shape_cast %4 : vector<8x128xf32> to vector<1x8x128xf32>
    tpu.vector_store %arg4[%c0_4, %c0_5, %c0_6], %7 {strides = array<i32>} : memref<3x8x128xf32, #tpu.memory_space<vmem>>, vector<1x8x128xf32>,
    %c0_7 = arith.constant 0 : index
    %c0_8 = arith.constant 0 : index
    %c0_9 = arith.constant 0 : index
    %8 = vector.load %arg2[%c0_7, %c0_8, %c0_9] : memref<2x128x128xf32, #tpu.memory_space<vmem>>, vector<1x128x128xf32>
    %9 = vector.shape_cast %8 : vector<1x128x128xf32> to vector<128x128xf32>
    %cst_10 = arith.constant dense<0.000000e+00> : vector<8x128xf32>
    %10 = tpu.matmul %4, %9, %cst_10 {dimension_numbers = #tpu.dot_dimension_numbers<[1], [0], [0], [1], [0, 0, 1, 1], [], []>} : vector<8x128xf32>, vector<128x128xf32>, vector<8x128xf32> -> vector<8x128xf32>
    %cst_11 = arith.constant 0.000000e+00 : f32
    %11 = vector.broadcast %cst_11 : f32 to vector<8x128xf32>
    %12 = arith.maximumf %10, %11 : vector<8x128xf32>
    %c1 = arith.constant 1 : index
    %c0_12 = arith.constant 0 : index
    %c0_13 = arith.constant 0 : index
    %13 = vector.load %arg4[%c1, %c0_12, %c0_13] : memref<3x8x128xf32, #tpu.memory_space<vmem>>, vector<1x8x128xf32>
    %14 = vector.shape_cast %13 : vector<1x8x128xf32> to vector<8x128xf32>
    %15 = vector.shape_cast %12 : vector<8x128xf32> to vector<1x8x128xf32>
    tpu.vector_store %arg4[%c1, %c0_12, %c0_13], %15 {strides = array<i32>} : memref<3x8x128xf32, #tpu.memory_space<vmem>>, vector<1x8x128xf32>,
    %c1_14 = arith.constant 1 : index
    %c0_15 = arith.constant 0 : index
    %c0_16 = arith.constant 0 : index
    %16 = vector.load %arg2[%c1_14, %c0_15, %c0_16] : memref<2x128x128xf32, #tpu.memory_space<vmem>>, vector<1x128x128xf32>
    %17 = vector.shape_cast %16 : vector<1x128x128xf32> to vector<128x128xf32>
    %cst_17 = arith.constant dense<0.000000e+00> : vector<8x128xf32>
    %18 = tpu.matmul %12, %17, %cst_17 {dimension_numbers = #tpu.dot_dimension_numbers<[1], [0], [0], [1], [0, 0, 1, 1], [], []>} : vector<8x128xf32>, vector<128x128xf32>, vector<8x128xf32> -> vector<8x128xf32>
    %cst_18 = arith.constant 0.000000e+00 : f32
    %19 = vector.broadcast %cst_18 : f32 to vector<8x128xf32>
    %20 = arith.maximumf %18, %19 : vector<8x128xf32>
    %c2 = arith.constant 2 : index
    %c0_19 = arith.constant 0 : index
    %c0_20 = arith.constant 0 : index
    %21 = vector.load %arg4[%c2, %c0_19, %c0_20] : memref<3x8x128xf32, #tpu.memory_space<vmem>>, vector<1x8x128xf32>
    %22 = vector.shape_cast %21 : vector<1x8x128xf32> to vector<8x128xf32>
    %23 = vector.shape_cast %20 : vector<8x128xf32> to vector<1x8x128xf32>
    tpu.vector_store %arg4[%c2, %c0_19, %c0_20], %23 {strides = array<i32>} : memref<3x8x128xf32, #tpu.memory_space<vmem>>, vector<1x8x128xf32>,
    %c0_21 = arith.constant 0 : index
    %c0_22 = arith.constant 0 : index
    %24 = vector.load %arg3[%c0_21, %c0_22] : memref<128x128xf32, #tpu.memory_space<vmem>>, vector<128x128xf32>
    %cst_23 = arith.constant dense<0.000000e+00> : vector<8x128xf32>
    %25 = tpu.matmul %20, %24, %cst_23 {dimension_numbers = #tpu.dot_dimension_numbers<[1], [0], [0], [1], [0, 0, 1, 1], [], []>} : vector<8x128xf32>, vector<128x128xf32>, vector<8x128xf32> -> vector<8x128xf32>
    %c0_24 = arith.constant 0 : index
    %c0_25 = arith.constant 0 : index
    %26 = vector.load %arg5[%c0_24, %c0_25] : memref<8x128xf32, #tpu.memory_space<vmem>>, vector<8x128xf32>
    tpu.vector_store %arg5[%c0_24, %c0_25], %25 {strides = array<i32>} : memref<8x128xf32, #tpu.memory_space<vmem>>, vector<8x128xf32>,
    return
  }
}

</mosaic_0001>

<llo_original>
// kernel: tpu_custom_call.1
$region0: #{tpu_custom_call.1}
  #allocation0 [shape = 'u32[]', space=smem, size = 0x4, offset = 0x4, fixed_abs, tag = 'smem constant byte address 0x4 - core index']
  #allocation1 [shape = 'u32[144,128]{1,0:T(1,128)}', space=vmem, size = 0x12000, scoped, tag = 'internal scratch']
  %s0 = inlined_call_operand.hbm [shape: f32[8,64], index: 0, kind: input, shape index: {}]
  %s1 = inlined_call_operand.hbm [shape: f32[64,128], index: 1, kind: input, shape index: {}]
  %s2 = inlined_call_operand.hbm [shape: f32[2,128,128], index: 2, kind: input, shape index: {}]
  %s3 = inlined_call_operand.hbm [shape: f32[128,128], index: 3, kind: input, shape index: {}]
  %s4 = inlined_call_operand.hbm [shape: f32[3,8,128], index: 4, kind: output, shape index: {0}]
  %s5 = inlined_call_operand.hbm [shape: f32[8,128], index: 5, kind: output, shape index: {1}]
  %6 = xla_tuple %s4, %s5
  %s7 = sld [smem:[#allocation0]]
  $region50: #{tpu_custom_call.1} parent=0
    _
  %s9 = ssub.s32 1, %s7
  %s10 = scalar_select 0, %s9, %s7
  $region1: #{tpu_custom_call.1} parent=0
    #allocation2 [shape = 'u8[4096]{0}', space=vmem, size = 0x1000, scoped, tag = 'input window, operand 0, single buffered']
    #allocation3 [shape = 's32[1]{0}', space=sflag, size = 0x4, scoped, tag = 'scoped memory for tpu_custom_call.1']
    #allocation4 [shape = 's32[1]{0}', space=sflag, size = 0x4, scoped, tag = 'scoped memory for tpu_custom_call.1']
    #allocation5 [shape = 'u8[32768]{0}', space=vmem, size = 0x8000, scoped, tag = 'input window, operand 1, single buffered']
    #allocation6 [shape = 's32[1]{0}', space=sflag, size = 0x4, scoped, tag = 'scoped memory for tpu_custom_call.1']
    #allocation7 [shape = 'u8[131072]{0}', space=vmem, size = 0x20000, scoped, tag = 'input window, operand 2, single buffered']
    #allocation8 [shape = 'u8[65536]{0}', space=vmem, size = 0x10000, scoped, tag = 'input window, operand 3, single buffered']
    #allocation9 [shape = 's32[1]{0}', space=sflag, size = 0x4, scoped, tag = 'scoped memory for tpu_custom_call.1']
    #allocation10 [shape = 'u8[12288]{0}', space=vmem, size = 0x3000, scoped, tag = 'output window, operand 0, single buffered']
    #allocation11 [shape = 'u8[4096]{0}', space=vmem, size = 0x1000, scoped, tag = 'output window, operand 1, single buffered']
    #allocation12 [shape = 's32[1]{0}', space=sflag, size = 0x4, scoped, tag = 'scoped memory for tpu_custom_call.1']
    %11 = vsyncpa [#allocation3], 0
    %12 = vsyncpa [#allocation6], 0
    %13 = vsyncpa [#allocation9], 0
    %14 = vsyncpa [#allocation4], 0
    %15 = vsyncpa [#allocation12], 0
    // Predicated region
    $region2: #{tpu_custom_call.1} parent=1 // pred_check
      _
    $region3: #{tpu_custom_call.1} parent=1 // pred_check_branch
      %17 = sbr.rel (0) target = $region5
    $region4: #{tpu_custom_call.1} parent=1 // pred_region
      %s19 = ssub.s32 128, 128
      %20 = vsyncadd [#allocation3], %s19
      %s22 = sshll.u32 [#allocation2], 4
      %s23 = int_to_ptr.vmem [resolvable:$true] %s22
      %25 = dma.hbm_to_vmem [thread:$0]  %s0, 128, %s23, [#allocation3]
    $region5: #{tpu_custom_call.1} parent=1 // pred_fallthru
      _
    // Predicated region
    $region6: #{tpu_custom_call.1} parent=1 // pred_check
      _
    $region7: #{tpu_custom_call.1} parent=1 // pred_check_branch
      %27 = sbr.rel (0) target = $region9
    $region8: #{tpu_custom_call.1} parent=1 // pred_region
      %s29 = ssub.s32 1024, 1024
      %30 = vsyncadd [#allocation6], %s29
      %s31 = sshll.u32 [#allocation5], 4
      %s32 = int_to_ptr.vmem [resolvable:$true] %s31
      %37 = dma.hbm_to_vmem [thread:$0]  %s1, 1024, %s32, [#allocation6], 128, 128, 8
    $region9: #{tpu_custom_call.1} parent=1 // pred_fallthru
      _
    // Predicated region
    $region10: #{tpu_custom_call.1} parent=1 // pred_check
      _
    $region11: #{tpu_custom_call.1} parent=1 // pred_check_branch
      %39 = sbr.rel (0) target = $region13
    $region12: #{tpu_custom_call.1} parent=1 // pred_region
      %s41 = ssub.s32 4096, 4096
      %42 = vsyncadd [#allocation6], %s41
      %s43 = sshll.u32 [#allocation7], 4
      %s44 = int_to_ptr.vmem [resolvable:$true] %s43
      %49 = dma.hbm_to_vmem [thread:$0]  %s2, 4096, %s44, [#allocation6], 128, 128, 8
    $region13: #{tpu_custom_call.1} parent=1 // pred_fallthru
      _
    // Predicated region
    $region14: #{tpu_custom_call.1} parent=1 // pred_check
      _
    $region15: #{tpu_custom_call.1} parent=1 // pred_check_branch
      %51 = sbr.rel (0) target = $region17
    $region16: #{tpu_custom_call.1} parent=1 // pred_region
      %s53 = ssub.s32 2048, 2048
      %54 = vsyncadd [#allocation9], %s53
      %s55 = sshll.u32 [#allocation8], 4
      %s56 = int_to_ptr.vmem [resolvable:$true] %s55
      %61 = dma.hbm_to_vmem [thread:$0]  %s3, 2048, %s56, [#allocation9], 128, 128, 8
    $region17: #{tpu_custom_call.1} parent=1 // pred_fallthru
      _
    // Predicated region
    $region18: #{tpu_custom_call.1} parent=1 // pred_check
      _
    $region19: #{tpu_custom_call.1} parent=1 // pred_check_branch
      %63 = sbr.rel (0) target = $region21
    $region20: #{tpu_custom_call.1} parent=1 // pred_region
      %64 = dma.done [#allocation3], 128
    $region21: #{tpu_custom_call.1} parent=1 // pred_fallthru
      _
    // Predicated region
    $region22: #{tpu_custom_call.1} parent=1 // pred_check
      _
    $region23: #{tpu_custom_call.1} parent=1 // pred_check_branch
      %66 = sbr.rel (0) target = $region25
    $region24: #{tpu_custom_call.1} parent=1 // pred_region
      %67 = dma.done [#allocation6], 1024
    $region25: #{tpu_custom_call.1} parent=1 // pred_fallthru
      _
    // Predicated region
    $region26: #{tpu_custom_call.1} parent=1 // pred_check
      _
    $region27: #{tpu_custom_call.1} parent=1 // pred_check_branch
      %69 = sbr.rel (0) target = $region29
    $region28: #{tpu_custom_call.1} parent=1 // pred_region
      %70 = dma.done [#allocation6], 4096
    $region29: #{tpu_custom_call.1} parent=1 // pred_fallthru
      _
    // Predicated region
    $region30: #{tpu_custom_call.1} parent=1 // pred_check
      _
    $region31: #{tpu_custom_call.1} parent=1 // pred_check_branch
      %72 = sbr.rel (0) target = $region33
    $region32: #{tpu_custom_call.1} parent=1 // pred_region
      %73 = dma.done [#allocation9], 2048
    $region33: #{tpu_custom_call.1} parent=1 // pred_fallthru
      _
    %v74 = vld [vmem:[#allocation2] sm:$0xff]
    %v75 = vld [vmem:[#allocation5] sm:$0xff]
    %v76 = vld [vmem:[#allocation5 + $0x8] sm:$0xff]
    %v77 = vld [vmem:[#allocation5 + $0x10] sm:$0xff]
    %v78 = vld [vmem:[#allocation5 + $0x18] sm:$0xff]
    %v79 = vld [vmem:[#allocation5 + $0x20] sm:$0xff]
    %v80 = vld [vmem:[#allocation5 + $0x28] sm:$0xff]
    %v81 = vld [vmem:[#allocation5 + $0x30] sm:$0xff]
    %v82 = vld [vmem:[#allocation5 + $0x38] sm:$0xff]
    %vm83 = vcmask 523264
    %v85 = vsel %vm83, %v74, 0
    %87 = vmatprep.subr.mxu0 0.0
    %88 = vmatpush1.msra.mxu0 %v75
    %89 = vmatprep.subr.mxu0 0.0
    %90 = vmatpush1.msra.mxu0 %v76
    %91 = vmatprep.subr.mxu0 0.0
    %92 = vmatpush1.msra.mxu0 %v77
    %93 = vmatprep.subr.mxu0 0.0
    %94 = vmatpush1.msra.mxu0 %v78
    %95 = vmatprep.subr.mxu0 0.0
    %96 = vmatpush1.msra.mxu0 %v79
    %97 = vmatprep.subr.mxu0 0.0
    %98 = vmatpush1.msra.mxu0 %v80
    %99 = vmatprep.subr.mxu0 0.0
    %100 = vmatpush1.msra.mxu0 %v81
    %101 = vmatprep.subr.mxu0 0.0
    %102 = vmatpush1.msra.mxu0 %v82
    %103 = vmatprep.subr.mxu0 0.0
    %104 = vmatpush1.msra.mxu0 0.0
    %105 = vmatprep.subr.mxu0 0.0
    %106 = vmatpush1.msra.mxu0 0.0
    %107 = vmatprep.subr.mxu0 0.0
    %108 = vmatpush1.msra.mxu0 0.0
    %109 = vmatprep.subr.mxu0 0.0
    %110 = vmatpush1.msra.mxu0 0.0
    %111 = vmatprep.subr.mxu0 0.0
    %112 = vmatpush1.msra.mxu0 0.0
    %113 = vmatprep.subr.mxu0 0.0
    %114 = vmatpush1.msra.mxu0 0.0
    %115 = vmatprep.subr.mxu0 0.0
    %116 = vmatpush1.msra.mxu0 0.0
    %117 = vmatprep.subr.mxu0 0.0
    %118 = vmatpush1.msra.mxu0 0.0
    %119 = vmatprep.subr.mxu0 0.0
    %120 = vmatpush1.msra.mxu0 0.0
    %121 = vmatprep.subr.mxu0 0.0
    %122 = vmatpush1.msra.mxu0 0.0
    %123 = vmatprep.subr.mxu0 0.0
    %124 = vmatpush1.msra.mxu0 0.0
    %125 = vmatprep.subr.mxu0 0.0
    %126 = vmatpush1.msra.mxu0 0.0
    %127 = vmatprep.subr.mxu0 0.0
    %128 = vmatpush1.msra.mxu0 0.0
    %129 = vmatprep.subr.mxu0 0.0
    %130 = vmatpush1.msra.mxu0 0.0
    %131 = vmatprep.subr.mxu0 0.0
    %132 = vmatpush1.msra.mxu0 0.0
    %133 = vmatprep.subr.mxu0 0.0
    %134 = vmatpush1.msra.mxu0 0.0
    %135 = vmatprep.subr.mxu0 0.0
    %136 = vmatpush1.msra.mxu0 0.0
    %137 = vmatprep.subr.mxu0 0.0
    %138 = vmatpush1.msra.mxu0 0.0
    %139 = vmatprep.subr.mxu0 0.0
    %140 = vmatpush1.msra.mxu0 0.0
    %141 = vmatprep.subr.mxu0 0.0
    %142 = vmatpush1.msra.mxu0 0.0
    %143 = vmatprep.subr.mxu0 0.0
    %144 = vmatpush1.msra.mxu0 0.0
    %145 = vmatprep.subr.mxu0 0.0
    %146 = vmatpush1.msra.mxu0 0.0
    %147 = vmatprep.subr.mxu0 0.0
    %148 = vmatpush1.msra.mxu0 0.0
    %149 = vmatprep.subr.mxu0 0.0
    %150 = vmatpush1.msra.mxu0 0.0
    %151 = vmatprep.mubr.f32.mxu0 0.0
    %152 = vmatmul.mubr.f32.gmra.mrb[0].mxu0 %v85
    %v153 = vpop.f32.mrb[0].mxu0
    %v154 = vadd.f32 0.0, %v153
    %v155 = vpop.f32.mrb[0].mxu0
    %156 = vdwg.mxu0
    %v157 = vmax.f32 %v154, 0.0
    %158 = vst [vmem:[#allocation10] sm:$0xff] %v157
    %v159 = vld [vmem:[#allocation7] sm:$0xff]
    %v160 = vld [vmem:[#allocation7 + $0x8] sm:$0xff]
    %v161 = vld [vmem:[#allocation7 + $0x10] sm:$0xff]
    %v162 = vld [vmem:[#allocation7 + $0x18] sm:$0xff]
    %v163 = vld [vmem:[#allocation7 + $0x20] sm:$0xff]
    %v164 = vld [vmem:[#allocation7 + $0x28] sm:$0xff]
    %v165 = vld [vmem:[#allocation7 + $0x30] sm:$0xff]
    %v166 = vld [vmem:[#allocation7 + $0x38] sm:$0xff]
    %v167 = vld [vmem:[#allocation7 + $0x40] sm:$0xff]
    %v168 = vld [vmem:[#allocation7 + $0x48] sm:$0xff]
    %v169 = vld [vmem:[#allocation7 + $0x50] sm:$0xff]
    %v170 = vld [vmem:[#allocation7 + $0x58] sm:$0xff]
    %v171 = vld [vmem:[#allocation7 + $0x60] sm:$0xff]
    %v172 = vld [vmem:[#allocation7 + $0x68] sm:$0xff]
    %v173 = vld [vmem:[#allocation7 + $0x70] sm:$0xff]
    %v174 = vld [vmem:[#allocation7 + $0x78] sm:$0xff]
    %175 = vmatprep.subr.mxu0 0.0
    %176 = vmatpush1.msra.mxu0 %v159
    %177 = vmatprep.subr.mxu0 0.0
    %178 = vmatpush1.msra.mxu0 %v160
    %179 = vmatprep.subr.mxu0 0.0
    %180 = vmatpush1.msra.mxu0 %v161
    %181 = vmatprep.subr.mxu0 0.0
    %182 = vmatpush1.msra.mxu0 %v162
    %183 = vmatprep.subr.mxu0 0.0
    %184 = vmatpush1.msra.mxu0 %v163
    %185 = vmatprep.subr.mxu0 0.0
    %186 = vmatpush1.msra.mxu0 %v164
    %187 = vmatprep.subr.mxu0 0.0
    %188 = vmatpush1.msra.mxu0 %v165
    %189 = vmatprep.subr.mxu0 0.0
    %190 = vmatpush1.msra.mxu0 %v166
    %191 = vmatprep.subr.mxu0 0.0
    %192 = vmatpush1.msra.mxu0 %v167
    %193 = vmatprep.subr.mxu0 0.0
    %194 = vmatpush1.msra.mxu0 %v168
    %195 = vmatprep.subr.mxu0 0.0
    %196 = vmatpush1.msra.mxu0 %v169
    %197 = vmatprep.subr.mxu0 0.0
    %198 = vmatpush1.msra.mxu0 %v170
    %199 = vmatprep.subr.mxu0 0.0
    %200 = vmatpush1.msra.mxu0 %v171
    %201 = vmatprep.subr.mxu0 0.0
    %202 = vmatpush1.msra.mxu0 %v172
    %203 = vmatprep.subr.mxu0 0.0
    %204 = vmatpush1.msra.mxu0 %v173
    %205 = vmatprep.subr.mxu0 0.0
    %206 = vmatpush1.msra.mxu0 %v174
    %207 = vmatprep.subr.mxu0 0.0
    %208 = vmatpush1.msra.mxu0 0.0
    %209 = vmatprep.subr.mxu0 0.0
    %210 = vmatpush1.msra.mxu0 0.0
    %211 = vmatprep.subr.mxu0 0.0
    %212 = vmatpush1.msra.mxu0 0.0
    %213 = vmatprep.subr.mxu0 0.0
    %214 = vmatpush1.msra.mxu0 0.0
    %215 = vmatprep.subr.mxu0 0.0
    %216 = vmatpush1.msra.mxu0 0.0
    %217 = vmatprep.subr.mxu0 0.0
    %218 = vmatpush1.msra.mxu0 0.0
    %219 = vmatprep.subr.mxu0 0.0
    %220 = vmatpush1.msra.mxu0 0.0
    %221 = vmatprep.subr.mxu0 0.0
    %222 = vmatpush1.msra.mxu0 0.0
    %223 = vmatprep.subr.mxu0 0.0
    %224 = vmatpush1.msra.mxu0 0.0
    %225 = vmatprep.subr.mxu0 0.0
    %226 = vmatpush1.msra.mxu0 0.0
    %227 = vmatprep.subr.mxu0 0.0
    %228 = vmatpush1.msra.mxu0 0.0
    %229 = vmatprep.subr.mxu0 0.0
    %230 = vmatpush1.msra.mxu0 0.0
    %231 = vmatprep.subr.mxu0 0.0
    %232 = vmatpush1.msra.mxu0 0.0
    %233 = vmatprep.subr.mxu0 0.0
    %234 = vmatpush1.msra.mxu0 0.0
    %235 = vmatprep.subr.mxu0 0.0
    %236 = vmatpush1.msra.mxu0 0.0
    %237 = vmatprep.subr.mxu0 0.0
    %238 = vmatpush1.msra.mxu0 0.0
    %239 = vmatprep.mubr.f32.mxu0 0.0
    %240 = vmatmul.mubr.f32.gmra.mrb[0].mxu0 %v157
    %v241 = vpop.f32.mrb[0].mxu0
    %v242 = vadd.f32 0.0, %v241
    %v243 = vpop.f32.mrb[0].mxu0
    %244 = vdwg.mxu0
    %v245 = vmax.f32 %v242, 0.0
    %s246 = scalar_lea.vmem [#allocation10], 8
    %247 = vst [vmem:[%s246] sm:$0xff] %v245
    %s248 = scalar_lea.vmem [#allocation7], 128
    %v249 = vld [vmem:[%s248] sm:$0xff]
    %v250 = vld [vmem:[%s248 + $0x8] sm:$0xff]
    %v251 = vld [vmem:[%s248 + $0x10] sm:$0xff]
    %v252 = vld [vmem:[%s248 + $0x18] sm:$0xff]
    %v253 = vld [vmem:[%s248 + $0x20] sm:$0xff]
    %v254 = vld [vmem:[%s248 + $0x28] sm:$0xff]
    %v255 = vld [vmem:[%s248 + $0x30] sm:$0xff]
    %v256 = vld [vmem:[%s248 + $0x38] sm:$0xff]
    %v257 = vld [vmem:[%s248 + $0x40] sm:$0xff]
    %v258 = vld [vmem:[%s248 + $0x48] sm:$0xff]
    %v259 = vld [vmem:[%s248 + $0x50] sm:$0xff]
    %v260 = vld [vmem:[%s248 + $0x58] sm:$0xff]
    %v261 = vld [vmem:[%s248 + $0x60] sm:$0xff]
    %v262 = vld [vmem:[%s248 + $0x68] sm:$0xff]
    %v263 = vld [vmem:[%s248 + $0x70] sm:$0xff]
    %v264 = vld [vmem:[%s248 + $0x78] sm:$0xff]
    %265 = vmatprep.subr.mxu0 0.0
    %266 = vmatpush1.msra.mxu0 %v249
    %267 = vmatprep.subr.mxu0 0.0
    %268 = vmatpush1.msra.mxu0 %v250
    %269 = vmatprep.subr.mxu0 0.0
    %270 = vmatpush1.msra.mxu0 %v251
    %271 = vmatprep.subr.mxu0 0.0
    %272 = vmatpush1.msra.mxu0 %v252
    %273 = vmatprep.subr.mxu0 0.0
    %274 = vmatpush1.msra.mxu0 %v253
    %275 = vmatprep.subr.mxu0 0.0
    %276 = vmatpush1.msra.mxu0 %v254
    %277 = vmatprep.subr.mxu0 0.0
    %278 = vmatpush1.msra.mxu0 %v255
    %279 = vmatprep.subr.mxu0 0.0
    %280 = vmatpush1.msra.mxu0 %v256
    %281 = vmatprep.subr.mxu0 0.0
    %282 = vmatpush1.msra.mxu0 %v257
    %283 = vmatprep.subr.mxu0 0.0
    %284 = vmatpush1.msra.mxu0 %v258
    %285 = vmatprep.subr.mxu0 0.0
    %286 = vmatpush1.msra.mxu0 %v259
    %287 = vmatprep.subr.mxu0 0.0
    %288 = vmatpush1.msra.mxu0 %v260
    %289 = vmatprep.subr.mxu0 0.0
    %290 = vmatpush1.msra.mxu0 %v261
    %291 = vmatprep.subr.mxu0 0.0
    %292 = vmatpush1.msra.mxu0 %v262
    %293 = vmatprep.subr.mxu0 0.0
    %294 = vmatpush1.msra.mxu0 %v263
    %295 = vmatprep.subr.mxu0 0.0
    %296 = vmatpush1.msra.mxu0 %v264
    %297 = vmatprep.subr.mxu0 0.0
    %298 = vmatpush1.msra.mxu0 0.0
    %299 = vmatprep.subr.mxu0 0.0
    %300 = vmatpush1.msra.mxu0 0.0
    %301 = vmatprep.subr.mxu0 0.0
    %302 = vmatpush1.msra.mxu0 0.0
    %303 = vmatprep.subr.mxu0 0.0
    %304 = vmatpush1.msra.mxu0 0.0
    %305 = vmatprep.subr.mxu0 0.0
    %306 = vmatpush1.msra.mxu0 0.0
    %307 = vmatprep.subr.mxu0 0.0
    %308 = vmatpush1.msra.mxu0 0.0
    %309 = vmatprep.subr.mxu0 0.0
    %310 = vmatpush1.msra.mxu0 0.0
    %311 = vmatprep.subr.mxu0 0.0
    %312 = vmatpush1.msra.mxu0 0.0
    %313 = vmatprep.subr.mxu0 0.0
    %314 = vmatpush1.msra.mxu0 0.0
    %315 = vmatprep.subr.mxu0 0.0
    %316 = vmatpush1.msra.mxu0 0.0
    %317 = vmatprep.subr.mxu0 0.0
    %318 = vmatpush1.msra.mxu0 0.0
    %319 = vmatprep.subr.mxu0 0.0
    %320 = vmatpush1.msra.mxu0 0.0
    %321 = vmatprep.subr.mxu0 0.0
    %322 = vmatpush1.msra.mxu0 0.0
    %323 = vmatprep.subr.mxu0 0.0
    %324 = vmatpush1.msra.mxu0 0.0
    %325 = vmatprep.subr.mxu0 0.0
    %326 = vmatpush1.msra.mxu0 0.0
    %327 = vmatprep.subr.mxu0 0.0
    %328 = vmatpush1.msra.mxu0 0.0
    %329 = vmatprep.mubr.f32.mxu0 0.0
    %330 = vmatmul.mubr.f32.gmra.mrb[0].mxu0 %v245
    %v331 = vpop.f32.mrb[0].mxu0
    %v332 = vadd.f32 0.0, %v331
    %v333 = vpop.f32.mrb[0].mxu0
    %334 = vdwg.mxu0
    %v335 = vmax.f32 %v332, 0.0
    %s336 = scalar_lea.vmem [#allocation10], 16
    %337 = vst [vmem:[%s336] sm:$0xff] %v335
    %v338 = vld [vmem:[#allocation8] sm:$0xff]
    %v339 = vld [vmem:[#allocation8 + $0x8] sm:$0xff]
    %v340 = vld [vmem:[#allocation8 + $0x10] sm:$0xff]
    %v341 = vld [vmem:[#allocation8 + $0x18] sm:$0xff]
    %v342 = vld [vmem:[#allocation8 + $0x20] sm:$0xff]
    %v343 = vld [vmem:[#allocation8 + $0x28] sm:$0xff]
    %v344 = vld [vmem:[#allocation8 + $0x30] sm:$0xff]
    %v345 = vld [vmem:[#allocation8 + $0x38] sm:$0xff]
    %v346 = vld [vmem:[#allocation8 + $0x40] sm:$0xff]
    %v347 = vld [vmem:[#allocation8 + $0x48] sm:$0xff]
    %v348 = vld [vmem:[#allocation8 + $0x50] sm:$0xff]
    %v349 = vld [vmem:[#allocation8 + $0x58] sm:$0xff]
    %v350 = vld [vmem:[#allocation8 + $0x60] sm:$0xff]
    %v351 = vld [vmem:[#allocation8 + $0x68] sm:$0xff]
    %v352 = vld [vmem:[#allocation8 + $0x70] sm:$0xff]
    %v353 = vld [vmem:[#allocation8 + $0x78] sm:$0xff]
    %354 = vmatprep.subr.mxu0 0.0
    %355 = vmatpush1.msra.mxu0 %v338
    %356 = vmatprep.subr.mxu0 0.0
    %357 = vmatpush1.msra.mxu0 %v339
    %358 = vmatprep.subr.mxu0 0.0
    %359 = vmatpush1.msra.mxu0 %v340
    %360 = vmatprep.subr.mxu0 0.0
    %361 = vmatpush1.msra.mxu0 %v341
    %362 = vmatprep.subr.mxu0 0.0
    %363 = vmatpush1.msra.mxu0 %v342
    %364 = vmatprep.subr.mxu0 0.0
    %365 = vmatpush1.msra.mxu0 %v343
    %366 = vmatprep.subr.mxu0 0.0
    %367 = vmatpush1.msra.mxu0 %v344
    %368 = vmatprep.subr.mxu0 0.0
    %369 = vmatpush1.msra.mxu0 %v345
    %370 = vmatprep.subr.mxu0 0.0
    %371 = vmatpush1.msra.mxu0 %v346
    %372 = vmatprep.subr.mxu0 0.0
    %373 = vmatpush1.msra.mxu0 %v347
    %374 = vmatprep.subr.mxu0 0.0
    %375 = vmatpush1.msra.mxu0 %v348
    %376 = vmatprep.subr.mxu0 0.0
    %377 = vmatpush1.msra.mxu0 %v349
    %378 = vmatprep.subr.mxu0 0.0
    %379 = vmatpush1.msra.mxu0 %v350
    %380 = vmatprep.subr.mxu0 0.0
    %381 = vmatpush1.msra.mxu0 %v351
    %382 = vmatprep.subr.mxu0 0.0
    %383 = vmatpush1.msra.mxu0 %v352
    %384 = vmatprep.subr.mxu0 0.0
    %385 = vmatpush1.msra.mxu0 %v353
    %386 = vmatprep.subr.mxu0 0.0
    %387 = vmatpush1.msra.mxu0 0.0
    %388 = vmatprep.subr.mxu0 0.0
    %389 = vmatpush1.msra.mxu0 0.0
    %390 = vmatprep.subr.mxu0 0.0
    %391 = vmatpush1.msra.mxu0 0.0
    %392 = vmatprep.subr.mxu0 0.0
    %393 = vmatpush1.msra.mxu0 0.0
    %394 = vmatprep.subr.mxu0 0.0
    %395 = vmatpush1.msra.mxu0 0.0
    %396 = vmatprep.subr.mxu0 0.0
    %397 = vmatpush1.msra.mxu0 0.0
    %398 = vmatprep.subr.mxu0 0.0
    %399 = vmatpush1.msra.mxu0 0.0
    %400 = vmatprep.subr.mxu0 0.0
    %401 = vmatpush1.msra.mxu0 0.0
    %402 = vmatprep.subr.mxu0 0.0
    %403 = vmatpush1.msra.mxu0 0.0
    %404 = vmatprep.subr.mxu0 0.0
    %405 = vmatpush1.msra.mxu0 0.0
    %406 = vmatprep.subr.mxu0 0.0
    %407 = vmatpush1.msra.mxu0 0.0
    %408 = vmatprep.subr.mxu0 0.0
    %409 = vmatpush1.msra.mxu0 0.0
    %410 = vmatprep.subr.mxu0 0.0
    %411 = vmatpush1.msra.mxu0 0.0
    %412 = vmatprep.subr.mxu0 0.0
    %413 = vmatpush1.msra.mxu0 0.0
    %414 = vmatprep.subr.mxu0 0.0
    %415 = vmatpush1.msra.mxu0 0.0
    %416 = vmatprep.subr.mxu0 0.0
    %417 = vmatpush1.msra.mxu0 0.0
    %418 = vmatprep.mubr.f32.mxu0 0.0
    %419 = vmatmul.mubr.f32.gmra.mrb[0].mxu0 %v335
    %v420 = vpop.f32.mrb[0].mxu0
    %v421 = vadd.f32 0.0, %v420
    %v422 = vpop.f32.mrb[0].mxu0
    %423 = vdwg.mxu0
    %424 = vst [vmem:[#allocation11] sm:$0xff] %v421
    // Predicated region
    $region34: #{tpu_custom_call.1} parent=1 // pred_check
      _
    $region35: #{tpu_custom_call.1} parent=1 // pred_check_branch
      %426 = sbr.rel (0) target = $region37
    $region36: #{tpu_custom_call.1} parent=1 // pred_region
      %s428 = ssub.s32 384, 384
      %429 = vsyncadd [#allocation4], %s428
      %s430 = sshll.u32 [#allocation10], 4
      %s431 = int_to_ptr.vmem [resolvable:$true] %s430
      %436 = dma.vmem_to_hbm [thread:$0]  %s431, 384, %s4, [#allocation4], 128, 128, 8
    $region37: #{tpu_custom_call.1} parent=1 // pred_fallthru
      _
    // Predicated region
    $region38: #{tpu_custom_call.1} parent=1 // pred_check
      _
    $region39: #{tpu_custom_call.1} parent=1 // pred_check_branch
      %438 = sbr.rel (0) target = $region41
    $region40: #{tpu_custom_call.1} parent=1 // pred_region
      %s440 = ssub.s32 128, 128
      %441 = vsyncadd [#allocation12], %s440
      %s443 = sshll.u32 [#allocation11], 4
      %s444 = int_to_ptr.vmem [resolvable:$true] %s443
      %446 = dma.vmem_to_hbm [thread:$0]  %s444, 128, %s5, [#allocation12]
    $region41: #{tpu_custom_call.1} parent=1 // pred_fallthru
      _
    // Predicated region
    $region42: #{tpu_custom_call.1} parent=1 // pred_check
      _
    $region43: #{tpu_custom_call.1} parent=1 // pred_check_branch
      %448 = sbr.rel (0) target = $region45
    $region44: #{tpu_custom_call.1} parent=1 // pred_region
      %449 = dma.done [#allocation4], 384
    $region45: #{tpu_custom_call.1} parent=1 // pred_fallthru
      _
    // Predicated region
    $region46: #{tpu_custom_call.1} parent=1 // pred_check
      _
    $region47: #{tpu_custom_call.1} parent=1 // pred_check_branch
      %451 = sbr.rel (0) target = $region49
    $region48: #{tpu_custom_call.1} parent=1 // pred_region
      %452 = dma.done [#allocation12], 128
    $region49: #{tpu_custom_call.1} parent=1 // pred_fallthru
      _
    %453 = vsyncpa [#allocation3], 1
    %454 = vsyncpa [#allocation6], 1
    %455 = vsyncpa [#allocation9], 1
    %456 = vsyncpa [#allocation4], 1
    %457 = vsyncpa [#allocation12], 1

</llo_original>
